<compile_context>
chip_gen: v6e
topology: v6e:2x2x1
jax: 0.10.0
libtpu: 0.0.40
codegen_flags: <defaults>
</compile_context>

<pallas_src>
import functools

import jax
import jax.numpy as jnp
from jax import lax
from jax.experimental import pallas as pl
from jax.experimental.pallas import tpu as pltpu

LANE = 128
CHUNK = 512            # rows per inner accumulation chunk


def _round_up(x, m):
    return (x + m - 1) // m * m


def _tpu_config():
    """Pick (max rows per block, #TensorCores) per chip generation, conservatively."""
    kind = ""
    try:
        dev = jax.devices()[0]
        if dev.platform == "tpu":
            kind = str(getattr(dev, "device_kind", "")).lower()
    except Exception:
        pass
    is_v7 = ("v7" in kind) or ("7x" in kind)
    is_v6 = ("v6" in kind) or ("6e" in kind)
    # 8192 rows -> 4 MiB per input per pipeline buffer (f32); 2 inputs x 2 buffers
    # = 16 MiB, fits the 32 MiB scoped-VMEM default of v6e/v7x. v5e's default is
    # only 16 MiB, so cap at 4096 rows there (and for unknown chips).
    tm_max = 8192 if (is_v7 or is_v6) else 4096
    ncores = 2 if is_v7 else 1   # v7x has 2 TensorCores; v5e/v6e have 1
    return tm_max, ncores


def _focal_sums_kernel(p_ref, t_ref, acc_ref, *, tm, chunk, rows, nb, npc,
                       two_core, binary_targets):
    """Accumulate [sum(bce), sum(targets)] into a resident (1,2,8,128) f32 block."""
    if two_core:
        i = pl.program_id(1)
        blk = pl.program_id(0) * npc + i     # logical row-block index
        total_blocks = 2 * npc
    else:
        i = pl.program_id(0)
        blk = i
        total_blocks = nb

    @pl.when(i == 0)
    def _init():
        acc_ref[...] = jnp.zeros_like(acc_ref)

    nchunks = tm // chunk

    def chunk_sums(p_c, t_c, mask):
        p = p_c.astype(jnp.float32)
        if binary_targets:
            # Targets in {0,1}: a single log (EUP) + select per element.
            # NOTE: silently wrong for soft labels; use binary_targets=False then.
            is_one = t_c == 1
            bce = -jnp.maximum(jnp.log(jnp.where(is_one, p, 1.0 - p)), -100.0)
            t_f = is_one.astype(jnp.float32)
        else:
            # Soft-target BCE (matches PyTorch binary_cross_entropy, log clamp -100).
            t_f = t_c.astype(jnp.float32)
            log_p = jnp.maximum(jnp.log(p), -100.0)
            log_1mp = jnp.maximum(jnp.log(1.0 - p), -100.0)
            bce = -(t_f * log_p + (1.0 - t_f) * log_1mp)
        if mask is not None:
            bce = jnp.where(mask, bce, 0.0)
            t_f = jnp.where(mask, t_f, 0.0)
        # Fold (chunk, 128) onto (8, 128): pure VPU adds, no cross-lane reduce.
        return (jnp.sum(bce.reshape(chunk // 8, 8, LANE), axis=0),
                jnp.sum(t_f.reshape(chunk // 8, 8, LANE), axis=0))

    def run(masked):
        if masked:
            valid = rows - blk * tm            # valid rows in this logical block
            row_iota = lax.broadcasted_iota(jnp.int32, (chunk, LANE), 0)

        def body(j, carry):
            s_bce, s_t = carry
            r0 = pl.multiple_of(j * chunk, chunk)
            p_c = p_ref[pl.ds(r0, chunk), :]
            t_c = t_ref[pl.ds(r0, chunk), :]
            mask = (row_iota < (valid - j * chunk)) if masked else None
            d_bce, d_t = chunk_sums(p_c, t_c, mask)
            return s_bce + d_bce, s_t + d_t

        zeros = jnp.zeros((8, LANE), jnp.float32)
        s_bce, s_t = lax.fori_loop(0, nchunks, body, (zeros, zeros), unroll=True)
        # One read-modify-write per accumulator slot per grid step.
        # (f32 per-lane partials: fine for any realistic n; for n >> 1e10 the
        # partial sums could start losing precision.)
        acc_ref[0, 0, :, :] += s_bce
        acc_ref[0, 1, :, :] += s_t

    # Only the last real block (and, on the 2-core grid, a possibly duplicated
    # block) can contain out-of-range rows; all other blocks take the fast path.
    needs_mask = (rows % tm != 0) or (total_blocks != nb)
    if not needs_mask:
        run(False)
    elif total_blocks == 1:
        run(True)
    else:
        is_edge = blk >= nb - 1
        pl.when(jnp.logical_not(is_edge))(lambda: run(False))
        pl.when(is_edge)(lambda: run(True))


def focal_loss(predictions, targets, gamma=2.0, alpha=0.4, binary_targets=True):
    """Pallas implementation of FocalLoss.forward (binary focal loss, mean).

    Set binary_targets=False if targets may be soft (non-{0,1}) labels.
    """
    n = predictions.size
    if not jnp.issubdtype(predictions.dtype, jnp.floating):
        predictions = predictions.astype(jnp.float32)
    if targets.dtype == jnp.bool_:
        targets = targets.astype(jnp.int8)
    # Targets are otherwise streamed in their native dtype (f32/bf16/int8/...)
    # and cast inside the kernel — no extra XLA upcast pass over the targets.

    p_flat = predictions.reshape(-1)
    t_flat = targets.reshape(-1)

    # Lane-align only (< 128 zero elements). Zero padding is self-masking
    # (p=0, t=0 -> bce=0, t=0) in both BCE paths; no rows_padded inflation.
    tail = (-n) % LANE
    if tail:
        p_flat = jnp.pad(p_flat, (0, tail))
        t_flat = jnp.pad(t_flat, (0, tail))
    rows = (n + tail) // LANE
    p2d = p_flat.reshape(rows, LANE)
    t2d = t_flat.reshape(rows, LANE)

    tm_max, ncores_hw = _tpu_config()
    if rows <= CHUNK:
        tm = _round_up(rows, 32)   # multiple of 32 keeps 1-byte target tiling happy
        chunk = tm
    else:
        tm = min(tm_max, _round_up(rows, CHUNK))
        chunk = CHUNK
    nb = pl.cdiv(rows, tm)

    two_core = (ncores_hw == 2) and (nb >= 2)
    if two_core:
        ncores = 2
        npc = pl.cdiv(nb, 2)
        grid = (2, npc)
        if 2 * npc == nb:
            in_map = lambda c, i: (c * npc + i, 0)
        else:
            # Clamp the single overhanging logical block onto the last real block;
            # the kernel masks its contribution to zero.
            in_map = lambda c, i: (jnp.minimum(c * npc + i, nb - 1), 0)
        out_map = lambda c, i: (c, 0, 0, 0)
        dim_sem = (pltpu.CORE_PARALLEL, pltpu.ARBITRARY)
    else:
        ncores = 1
        npc = nb
        grid = (nb,)
        in_map = lambda i: (i, 0)
        out_map = lambda i: (0, 0, 0, 0)
        dim_sem = (pltpu.ARBITRARY,)

    kernel = functools.partial(
        _focal_sums_kernel, tm=tm, chunk=chunk, rows=rows, nb=nb, npc=npc,
        two_core=two_core, binary_targets=bool(binary_targets))

    n_stream = rows * LANE
    cost = pl.CostEstimate(
        flops=10 * n_stream,
        transcendentals=(n_stream if binary_targets else 2 * n_stream),
        bytes_accessed=n_stream * (p2d.dtype.itemsize + t2d.dtype.itemsize),
    )

    partials = pl.pallas_call(
        kernel,
        out_shape=jax.ShapeDtypeStruct((ncores, 2, 8, LANE), jnp.float32),
        grid_spec=pltpu.PrefetchScalarGridSpec(
            num_scalar_prefetch=0,
            grid=grid,
            in_specs=[
                pl.BlockSpec((tm, LANE), in_map),
                pl.BlockSpec((tm, LANE), in_map),
            ],
            # Output block index is constant along the reduction axis -> the
            # (1,2,8,128) accumulator stays resident in VMEM (per core on v7x).
            out_specs=pl.BlockSpec((1, 2, 8, LANE), out_map),
        ),
        compiler_params=pltpu.CompilerParams(dimension_semantics=dim_sem),
        cost_estimate=cost,
    )(p2d, t2d)

    # O(1) epilogue in plain JAX: combine partials and do the scalar focal math.
    sums = jnp.sum(partials, axis=(0, 2, 3))          # [sum_bce, sum_targets]
    sum_bce, sum_t = sums[0], sums[1]

    n_f = jnp.float32(n)
    bce_mean = sum_bce / n_f                          # scalar BCE (mean reduction)
    p_t = jnp.exp(-bce_mean)
    # mean(alpha_tensor) = (1 - alpha) + (2*alpha - 1) * mean(targets)
    alpha_mean = (1.0 - alpha) + (2.0 * alpha - 1.0) * (sum_t / n_f)
    return alpha_mean * (1.0 - p_t) ** gamma * bce_mean


def _focal_loss_ref(predictions, targets, gamma=2.0, alpha=0.4):
    p = predictions.astype(jnp.float32)
    t = targets.astype(jnp.float32)
    log_p = jnp.maximum(jnp.log(p), -100.0)
    log_1mp = jnp.maximum(jnp.log(1.0 - p), -100.0)
    bce = jnp.mean(-(t * log_p + (1.0 - t) * log_1mp))
    p_t = jnp.exp(-bce)
    alpha_tensor = 1.0 - alpha + t * (2.0 * alpha - 1.0)
    f_loss = alpha_tensor * (1.0 - p_t) ** gamma * bce
    return jnp.mean(f_loss)


if __name__ == "__main__":
    key = jax.random.PRNGKey(0)
    k1, k2, k3, k4 = jax.random.split(key, 4)

    # predictions in [0,1] (as if post-sigmoid), binary targets; NCHW layout.
    x = jax.nn.sigmoid(jax.random.normal(k1, (2, 4, 16, 16), dtype=jnp.float32))
    y = jax.random.bernoulli(k2, 0.3, (2, 4, 16, 16)).astype(jnp.float32)

    loss = jax.block_until_ready(focal_loss(x, y, gamma=2.0, alpha=0.4))
    ref = jax.block_until_ready(_focal_loss_ref(x, y, gamma=2.0, alpha=0.4))
    assert jnp.allclose(loss, ref, rtol=1e-5, atol=1e-5), (loss, ref)

    # Narrow-dtype target streaming (int8 targets, no wrapper upcast).
    loss_i8 = jax.block_until_ready(
        focal_loss(x, y.astype(jnp.int8), gamma=2.0, alpha=0.4))
    assert jnp.allclose(loss_i8, ref, rtol=1e-5, atol=1e-5), (loss_i8, ref)

    # Unaligned shape: exercises the tiny lane pad + in-kernel row-mask path.
    x2 = jax.nn.sigmoid(jax.random.normal(k3, (2, 3, 9, 7), dtype=jnp.float32))
    y2 = jax.random.bernoulli(k4, 0.5, (2, 3, 9, 7)).astype(jnp.float32)
    loss2 = jax.block_until_ready(focal_loss(x2, y2, gamma=2.0, alpha=0.4))
    ref2 = jax.block_until_ready(_focal_loss_ref(x2, y2, gamma=2.0, alpha=0.4))
    assert jnp.allclose(loss2, ref2, rtol=1e-5, atol=1e-5), (loss2, ref2)

    print("KERNEL_OK")
</pallas_src>

<mosaic_0001>
module attributes {stable_mosaic.version = 11 : i64} {
  func.func @_focal_sums_kernel(%arg0: i32, %arg1: memref<32x128xf32, #tpu.memory_space<vmem>>, %arg2: memref<32x128xf32, #tpu.memory_space<vmem>>, %arg3: memref<1x2x8x128xf32, #tpu.memory_space<vmem>>) attributes {dimension_semantics = [#tpu.dimension_semantics<arbitrary>], iteration_bounds = array<i64: 1>, scalar_prefetch = 0 : i64, scratch_operands = 0 : i64, tpu.core_type = #tpu.core_type<tc>, window_params = [{transform_indices = @transform_0, window_bounds = array<i64: 32, 128>}, {transform_indices = @transform_1, window_bounds = array<i64: 32, 128>}, {pipeline_mode = #tpu.pipeline_mode<synchronous>, transform_indices = @transform_2, window_bounds = array<i64: 1, 2, 8, 128>}]} {
    %c0_i32 = arith.constant 0 : i32
    %0 = arith.cmpi eq, %arg0, %c0_i32 : i32
    %1 = arith.extui %0 : i1 to i32
    %c0_i32_0 = arith.constant 0 : i32
    %2 = arith.cmpi ne, %1, %c0_i32_0 : i32
    scf.if %2 {
      %cst_28 = arith.constant 0.000000e+00 : f32
      %51 = vector.broadcast %cst_28 : f32 to vector<1x2x8x128xf32>
      %c0_29 = arith.constant 0 : index
      %c0_30 = arith.constant 0 : index
      %c0_31 = arith.constant 0 : index
      %c0_32 = arith.constant 0 : index
      %52 = vector.load %arg3[%c0_29, %c0_30, %c0_31, %c0_32] : memref<1x2x8x128xf32, #tpu.memory_space<vmem>>, vector<1x2x8x128xf32>
      tpu.vector_store %arg3[%c0_29, %c0_30, %c0_31, %c0_32], %51 {strides = array<i32>} : memref<1x2x8x128xf32, #tpu.memory_space<vmem>>, vector<1x2x8x128xf32>,
    } else {
    }
    %c32_i32 = arith.constant 32 : i32
    %3 = arith.muli %arg0, %c32_i32 : i32
    %c16_i32 = arith.constant 16 : i32
    %4 = arith.subi %c16_i32, %3 : i32
    %5 = tpu.iota {dimensions = array<i32: 0>} : vector<32x128xi32>
    %cst = arith.constant 0.000000e+00 : f32
    %6 = vector.broadcast %cst : f32 to vector<8x128xf32>
    %c0_i32_1 = arith.constant 0 : i32
    %c32_i32_2 = arith.constant 32 : i32
    %7 = arith.muli %c0_i32_1, %c32_i32_2 : i32
    %8 = tpu.assume_multiple %7, 32 : i32
    %9 = arith.index_cast %8 : i32 to index
    %c0 = arith.constant 0 : index
    %10 = vector.load %arg1[%9, %c0] : memref<32x128xf32, #tpu.memory_space<vmem>>, vector<32x128xf32>
    %11 = arith.index_cast %8 : i32 to index
    %c0_3 = arith.constant 0 : index
    %12 = vector.load %arg2[%11, %c0_3] : memref<32x128xf32, #tpu.memory_space<vmem>>, vector<32x128xf32>
    %c32_i32_4 = arith.constant 32 : i32
    %13 = arith.muli %c0_i32_1, %c32_i32_4 : i32
    %14 = arith.subi %4, %13 : i32
    %15 = vector.broadcast %14 : i32 to vector<32x128xi32>
    %16 = arith.cmpi slt, %5, %15 : vector<32x128xi32>
    %cst_5 = arith.constant 1.000000e+00 : f32
    %17 = vector.broadcast %cst_5 : f32 to vector<32x128xf32>
    %18 = arith.cmpf oeq, %12, %17 : vector<32x128xf32>
    %cst_6 = arith.constant 1.000000e+00 : f32
    %19 = vector.broadcast %cst_6 : f32 to vector<32x128xf32>
    %20 = arith.subf %19, %10 : vector<32x128xf32>
    %21 = arith.select %18, %10, %20 : vector<32x128xi1>, vector<32x128xf32>
    %22 = math.log %21 : vector<32x128xf32>
    %cst_7 = arith.constant -1.000000e+02 : f32
    %23 = vector.broadcast %cst_7 : f32 to vector<32x128xf32>
    %24 = arith.maximumf %22, %23 : vector<32x128xf32>
    %cst_8 = arith.constant 0.000000e+00 : f32
    %25 = vector.broadcast %cst_8 : f32 to vector<32x128xf32>
    %26 = arith.subf %25, %24 : vector<32x128xf32>
    %27 = arith.extui %18 : vector<32x128xi1> to vector<32x128xi32>
    %28 = arith.sitofp %27 : vector<32x128xi32> to vector<32x128xf32>
    %cst_9 = arith.constant 0.000000e+00 : f32
    %29 = vector.broadcast %cst_9 : f32 to vector<32x128xf32>
    %30 = arith.select %16, %26, %29 : vector<32x128xi1>, vector<32x128xf32>
    %cst_10 = arith.constant 0.000000e+00 : f32
    %31 = vector.broadcast %cst_10 : f32 to vector<32x128xf32>
    %32 = arith.select %16, %28, %31 : vector<32x128xi1>, vector<32x128xf32>
    %33 = vector.shape_cast %30 : vector<32x128xf32> to vector<4x8x128xf32>
    %cst_11 = arith.constant dense<0.000000e+00> : vector<8x128xf32>
    %34 = vector.multi_reduction <add>, %33, %cst_11 [0] : vector<4x8x128xf32> to vector<8x128xf32>
    %35 = vector.shape_cast %32 : vector<32x128xf32> to vector<4x8x128xf32>
    %cst_12 = arith.constant dense<0.000000e+00> : vector<8x128xf32>
    %36 = vector.multi_reduction <add>, %35, %cst_12 [0] : vector<4x8x128xf32> to vector<8x128xf32>
    %37 = arith.addf %6, %34 : vector<8x128xf32>
    %38 = arith.addf %6, %36 : vector<8x128xf32>
    %c1_i32 = arith.constant 1 : i32
    %c0_13 = arith.constant 0 : index
    %c0_14 = arith.constant 0 : index
    %c0_15 = arith.constant 0 : index
    %c0_16 = arith.constant 0 : index
    %39 = vector.load %arg3[%c0_13, %c0_14, %c0_15, %c0_16] : memref<1x2x8x128xf32, #tpu.memory_space<vmem>>, vector<1x1x8x128xf32>
    %40 = vector.shape_cast %39 : vector<1x1x8x128xf32> to vector<8x128xf32>
    %41 = arith.addf %40, %37 : vector<8x128xf32>
    %c0_17 = arith.constant 0 : index
    %c0_18 = arith.constant 0 : index
    %c0_19 = arith.constant 0 : index
    %c0_20 = arith.constant 0 : index
    %42 = vector.load %arg3[%c0_17, %c0_18, %c0_19, %c0_20] : memref<1x2x8x128xf32, #tpu.memory_space<vmem>>, vector<1x1x8x128xf32>
    %43 = vector.shape_cast %42 : vector<1x1x8x128xf32> to vector<8x128xf32>
    %44 = vector.shape_cast %41 : vector<8x128xf32> to vector<1x1x8x128xf32>
    tpu.vector_store %arg3[%c0_17, %c0_18, %c0_19, %c0_20], %44 {strides = array<i32>} : memref<1x2x8x128xf32, #tpu.memory_space<vmem>>, vector<1x1x8x128xf32>,
    %c0_21 = arith.constant 0 : index
    %c1 = arith.constant 1 : index
    %c0_22 = arith.constant 0 : index
    %c0_23 = arith.constant 0 : index
    %45 = vector.load %arg3[%c0_21, %c1, %c0_22, %c0_23] : memref<1x2x8x128xf32, #tpu.memory_space<vmem>>, vector<1x1x8x128xf32>
    %46 = vector.shape_cast %45 : vector<1x1x8x128xf32> to vector<8x128xf32>
    %47 = arith.addf %46, %38 : vector<8x128xf32>
    %c0_24 = arith.constant 0 : index
    %c1_25 = arith.constant 1 : index
    %c0_26 = arith.constant 0 : index
    %c0_27 = arith.constant 0 : index
    %48 = vector.load %arg3[%c0_24, %c1_25, %c0_26, %c0_27] : memref<1x2x8x128xf32, #tpu.memory_space<vmem>>, vector<1x1x8x128xf32>
    %49 = vector.shape_cast %48 : vector<1x1x8x128xf32> to vector<8x128xf32>
    %50 = vector.shape_cast %47 : vector<8x128xf32> to vector<1x1x8x128xf32>
    tpu.vector_store %arg3[%c0_24, %c1_25, %c0_26, %c0_27], %50 {strides = array<i32>} : memref<1x2x8x128xf32, #tpu.memory_space<vmem>>, vector<1x1x8x128xf32>,
    return
  }
  func.func @transform_0(%arg0: i32) -> (i32, i32) {
    %c0_i32 = arith.constant 0 : i32
    %c0_i32_0 = arith.constant 0 : i32
    return %arg0, %c0_i32 : i32, i32
  }
  func.func @transform_1(%arg0: i32) -> (i32, i32) {
    %c0_i32 = arith.constant 0 : i32
    %c0_i32_0 = arith.constant 0 : i32
    return %arg0, %c0_i32 : i32, i32
  }
  func.func @transform_2(%arg0: i32) -> (i32, i32, i32, i32) {
    %c0_i32 = arith.constant 0 : i32
    %c0_i32_0 = arith.constant 0 : i32
    %c0_i32_1 = arith.constant 0 : i32
    %c0_i32_2 = arith.constant 0 : i32
    %c0_i32_3 = arith.constant 0 : i32
    return %c0_i32, %c0_i32_0, %c0_i32_1, %c0_i32_2 : i32, i32, i32, i32
  }
}

</mosaic_0001>

<llo_original>
// kernel: tpu_custom_call.1
$region0: #{tpu_custom_call.1}
  #allocation0 [shape = 'u32[]', space=smem, size = 0x4, offset = 0x4, fixed_abs, tag = 'smem constant byte address 0x4 - core index']
  #allocation1 [shape = 'u32[144,128]{1,0:T(1,128)}', space=vmem, size = 0x12000, scoped, tag = 'internal scratch']
  %s0 = inlined_call_operand.hbm [shape: f32[16,128], index: 0, kind: input, shape index: {}]
  %s1 = inlined_call_operand.hbm [shape: f32[16,128], index: 1, kind: input, shape index: {}]
  %s2 = inlined_call_operand.hbm [shape: f32[1,2,8,128], index: 2, kind: output, shape index: {}]
  %s3 = sld [smem:[#allocation0]]
  $region30: #{tpu_custom_call.1} parent=0
    _
  %s5 = ssub.s32 1, %s3
  %s6 = scalar_select 0, %s5, %s3
  $region1: #{tpu_custom_call.1} parent=0
    #allocation2 [shape = 'u8[16384]{0}', space=vmem, size = 0x4000, scoped, tag = 'input window, operand 0, single buffered']
    #allocation3 [shape = 's32[1]{0}', space=sflag, size = 0x4, scoped, tag = 'scoped memory for tpu_custom_call.1']
    #allocation4 [shape = 's32[1]{0}', space=sflag, size = 0x4, scoped, tag = 'scoped memory for tpu_custom_call.1']
    #allocation5 [shape = 'u8[16384]{0}', space=vmem, size = 0x4000, scoped, tag = 'input window, operand 1, single buffered']
    #allocation6 [shape = 's32[1]{0}', space=sflag, size = 0x4, scoped, tag = 'scoped memory for tpu_custom_call.1']
    #allocation7 [shape = 'u8[8192]{0}', space=vmem, size = 0x2000, scoped, tag = 'output window, operand 0, single buffered']
    %7 = vsyncpa [#allocation3], 0
    %8 = vsyncpa [#allocation6], 0
    %9 = vsyncpa [#allocation4], 0
    // Predicated region
    $region2: #{tpu_custom_call.1} parent=1 // pred_check
      _
    $region3: #{tpu_custom_call.1} parent=1 // pred_check_branch
      %11 = sbr.rel (0) target = $region5
    $region4: #{tpu_custom_call.1} parent=1 // pred_region
      %s13 = ssub.s32 512, 256
      %14 = vsyncadd [#allocation3], %s13
      %s15 = sshll.u32 [#allocation2], 4
      %s16 = int_to_ptr.vmem [resolvable:$true] %s15
      %21 = dma.hbm_to_vmem [thread:$0]  %s0, 256, %s16, [#allocation3], 128, 128, 8
    $region5: #{tpu_custom_call.1} parent=1 // pred_fallthru
      _
    // Predicated region
    $region6: #{tpu_custom_call.1} parent=1 // pred_check
      _
    $region7: #{tpu_custom_call.1} parent=1 // pred_check_branch
      %23 = sbr.rel (0) target = $region9
    $region8: #{tpu_custom_call.1} parent=1 // pred_region
      %s25 = ssub.s32 512, 256
      %26 = vsyncadd [#allocation6], %s25
      %s27 = sshll.u32 [#allocation5], 4
      %s28 = int_to_ptr.vmem [resolvable:$true] %s27
      %33 = dma.hbm_to_vmem [thread:$0]  %s1, 256, %s28, [#allocation6], 128, 128, 8
    $region9: #{tpu_custom_call.1} parent=1 // pred_fallthru
      _
    // Predicated region
    $region10: #{tpu_custom_call.1} parent=1 // pred_check
      _
    $region11: #{tpu_custom_call.1} parent=1 // pred_check_branch
      %35 = sbr.rel (0) target = $region13
    $region12: #{tpu_custom_call.1} parent=1 // pred_region
      %36 = dma.done [#allocation3], 512
    $region13: #{tpu_custom_call.1} parent=1 // pred_fallthru
      _
    // Predicated region
    $region14: #{tpu_custom_call.1} parent=1 // pred_check
      _
    $region15: #{tpu_custom_call.1} parent=1 // pred_check_branch
      %38 = sbr.rel (0) target = $region17
    $region16: #{tpu_custom_call.1} parent=1 // pred_region
      %39 = dma.done [#allocation6], 512
    $region17: #{tpu_custom_call.1} parent=1 // pred_fallthru
      _
    %p40 = scmp.eq.s32.totalorder 0, 0
    // Predicated region
    $region18: #{tpu_custom_call.1} parent=1 // pred_check
      %p41 = pneg %p40
    $region19: #{tpu_custom_call.1} parent=1 // pred_check_branch
      %43 = sbr.rel (%p41) target = $region21
    $region20: #{tpu_custom_call.1} parent=1 // pred_region
      %44 = vst [vmem:[#allocation7] sm:$0xff] 0.0
      %45 = vst [vmem:[#allocation7 + $0x8] sm:$0xff] 0.0
    $region21: #{tpu_custom_call.1} parent=1 // pred_fallthru
      _
    %s46 = smul.u32 0, 32
    %s47 = ssub.s32 16, %s46
    %v48 = vlaneseq
    %v49 = vshrl.u32 %v48, 7
    %v50 = vadd.s32 %v49, 8
    %v51 = vadd.s32 %v49, 16
    %v52 = vadd.s32 %v49, 24
    %v53 = vld [vmem:[#allocation2] sm:$0xff]
    %v54 = vld [vmem:[#allocation2 + $0x8] sm:$0xff]
    %v55 = vld [vmem:[#allocation2 + $0x10] sm:$0xff]
    %v56 = vld [vmem:[#allocation2 + $0x18] sm:$0xff]
    %v57 = vld [vmem:[#allocation5] sm:$0xff]
    %v58 = vld [vmem:[#allocation5 + $0x8] sm:$0xff]
    %v59 = vld [vmem:[#allocation5 + $0x10] sm:$0xff]
    %v60 = vld [vmem:[#allocation5 + $0x18] sm:$0xff]
    %v61 = vstv %s47
    %vm62 = vcmp.lt.s32.totalorder %v49, %v61
    %vm63 = vcmp.lt.s32.totalorder %v50, %v61
    %vm64 = vcmp.lt.s32.totalorder %v51, %v61
    %vm65 = vcmp.lt.s32.totalorder %v52, %v61
    %vm66 = vcmp.eq.f32.partialorder %v57, 1.0
    %vm67 = vcmp.eq.f32.partialorder %v58, 1.0
    %vm68 = vcmp.eq.f32.partialorder %v59, 1.0
    %vm69 = vcmp.eq.f32.partialorder %v60, 1.0
    %v70 = vsub.f32 1.0, %v53
    %v71 = vsub.f32 1.0, %v54
    %v72 = vsub.f32 1.0, %v55
    %v73 = vsub.f32 1.0, %v56
    %v74 = vsel %vm66, %v53, %v70
    %v75 = vsel %vm67, %v54, %v71
    %v76 = vsel %vm68, %v55, %v72
    %v77 = vsel %vm69, %v56, %v73
    %v78 = vlog2.pop %v74
    %v79 = vmul.f32 %v78, 0.6931472
    %v80 = vlog2.pop %v75
    %v81 = vmul.f32 %v80, 0.6931472
    %v82 = vlog2.pop %v76
    %v83 = vmul.f32 %v82, 0.6931472
    %v84 = vlog2.pop %v77
    %v85 = vmul.f32 %v84, 0.6931472
    %v86 = vmax.f32 %v79, -100.0
    %v87 = vmax.f32 %v81, -100.0
    %v88 = vmax.f32 %v83, -100.0
    %v89 = vmax.f32 %v85, -100.0
    %v90 = vsub.f32 0.0, %v86
    %v91 = vsub.f32 0.0, %v87
    %v92 = vsub.f32 0.0, %v88
    %v93 = vsub.f32 0.0, %v89
    %v94 = vsel %vm66, 1, 0
    %v95 = vsel %vm67, 1, 0
    %v96 = vsel %vm68, 1, 0
    %v97 = vsel %vm69, 1, 0
    %v98 = vcvt.s32.f32 %v94
    %v99 = vcvt.s32.f32 %v95
    %v100 = vcvt.s32.f32 %v96
    %v101 = vcvt.s32.f32 %v97
    %v102 = vsel %vm62, %v90, 0.0
    %v103 = vsel %vm63, %v91, 0.0
    %v104 = vsel %vm64, %v92, 0.0
    %v105 = vsel %vm65, %v93, 0.0
    %v106 = vsel %vm62, %v98, 0.0
    %v107 = vsel %vm63, %v99, 0.0
    %v108 = vsel %vm64, %v100, 0.0
    %v109 = vsel %vm65, %v101, 0.0
    %v110 = vadd.f32 %v102, %v103
    %v111 = vadd.f32 %v110, %v104
    %v112 = vadd.f32 %v111, %v105
    %v113 = vadd.f32 %v106, %v107
    %v114 = vadd.f32 %v113, %v108
    %v115 = vadd.f32 %v114, %v109
    %v116 = vadd.f32 %v112, 0.0
    %v117 = vadd.f32 %v115, 0.0
    %v118 = vld [vmem:[#allocation7] sm:$0xff]
    %v119 = vadd.f32 %v118, %v116
    %120 = vst [vmem:[#allocation7] sm:$0xff] %v119
    %s121 = scalar_lea.vmem [#allocation7], 8
    %v122 = vld [vmem:[%s121] sm:$0xff]
    %v123 = vadd.f32 %v122, %v117
    %124 = vst [vmem:[%s121] sm:$0xff] %v123
    // Predicated region
    $region22: #{tpu_custom_call.1} parent=1 // pred_check
      _
    $region23: #{tpu_custom_call.1} parent=1 // pred_check_branch
      %126 = sbr.rel (0) target = $region25
    $region24: #{tpu_custom_call.1} parent=1 // pred_region
      %s128 = ssub.s32 256, 256
      %129 = vsyncadd [#allocation4], %s128
      %s130 = sshll.u32 [#allocation7], 4
      %s131 = int_to_ptr.vmem [resolvable:$true] %s130
      %136 = dma.vmem_to_hbm [thread:$0]  %s131, 256, %s2, [#allocation4], 128, 128, 8
    $region25: #{tpu_custom_call.1} parent=1 // pred_fallthru
      _
    // Predicated region
    $region26: #{tpu_custom_call.1} parent=1 // pred_check
      _
    $region27: #{tpu_custom_call.1} parent=1 // pred_check_branch
      %138 = sbr.rel (0) target = $region29
    $region28: #{tpu_custom_call.1} parent=1 // pred_region
      %139 = dma.done [#allocation4], 256
    $region29: #{tpu_custom_call.1} parent=1 // pred_fallthru
      _
    %140 = vsyncpa [#allocation3], 1
    %141 = vsyncpa [#allocation6], 1
    %142 = vsyncpa [#allocation4], 1

</llo_original>
